<compile_context>
chip_gen: v5e
topology: v5e:2x2
jax: 0.10.0
libtpu: 0.0.40
codegen_flags: <defaults>
</compile_context>

<pallas_src>
import functools

import jax
import jax.numpy as jnp
from jax.experimental import pallas as pl
from jax.experimental.pallas import tpu as pltpu

EPS = 1e-5  # nn.InstanceNorm2d default eps


def _convlayer_kernel(p_ref, w_ref, b_ref, o_ref, sum_ref, sq_ref,
                      *, tile_hw, hw):
    # p_ref  : (CKK_pad, tile_hw)  bf16 im2col patches, one HW tile of one batch elem
    # w_ref  : (OC_pad, CKK_pad)   bf16 conv weight (resident)
    # b_ref  : (OC_pad, 1)         f32 conv bias (resident)
    # o_ref  : (OC_pad, HW)        f32 output block, resident across HW tiles
    # sum_ref/sq_ref: (OC_pad, 1)  f32 running per-channel sum / sum-of-squares
    t = pl.program_id(1)
    n_tiles = pl.num_programs(1)

    @pl.when(t == 0)
    def _init():
        sum_ref[...] = jnp.zeros_like(sum_ref)
        sq_ref[...] = jnp.zeros_like(sq_ref)

    # Conv2d tile as an MXU matmul with f32 accumulation.
    y = jnp.dot(w_ref[...], p_ref[...], preferred_element_type=jnp.float32)
    y = y + b_ref[...]                                   # (OC_pad, tile_hw)

    # Single-pass InstanceNorm statistics (lane reductions -> XLU, co-issued).
    sum_ref[...] += jnp.sum(y, axis=-1, keepdims=True)
    sq_ref[...] += jnp.sum(y * y, axis=-1, keepdims=True)

    off = pl.multiple_of(t * tile_hw, tile_hw)
    o_ref[:, pl.ds(off, tile_hw)] = y

    @pl.when(t == n_tiles - 1)
    def _finalize():
        inv_hw = 1.0 / float(hw)
        mean = sum_ref[...] * inv_hw                     # (OC_pad, 1)
        var = jnp.maximum(sq_ref[...] * inv_hw - mean * mean, 0.0)
        scale = jax.lax.rsqrt(var + EPS)                 # EUP rsqrt
        y_all = o_ref[...]                               # (OC_pad, HW)
        o_ref[...] = jnp.maximum((y_all - mean) * scale, 0.0)


def _im2col(x_padded, k, stride):
    # (N, C, Hp, Wp) -> (N, C*k*k, Hout*Wout); row index = c*k*k + ki*k + kj.
    # HW is already the minor axis -> no transpose needed for the kernel layout.
    n, c, hp, wp = x_padded.shape
    hout = (hp - k) // stride + 1
    wout = (wp - k) // stride + 1
    cols = []
    for ki in range(k):
        for kj in range(k):
            cols.append(
                x_padded[:, :, ki:ki + stride * hout:stride,
                               kj:kj + stride * wout:stride])
    p = jnp.stack(cols, axis=2)                   # (N, C, k*k, Hout, Wout)
    p = p.reshape(n, c * k * k, hout * wout)      # (N, CKK, HW)
    return p, hout, wout


def _round_up(x, m):
    return (x + m - 1) // m * m


def _choose_tile_hw(hw, ckk_pad, max_patch_tile_bytes):
    # Largest multiple of 128 that divides HW and keeps one bf16 patch tile
    # under the budget; fall back to a single full-HW tile.
    max_lanes = max(max_patch_tile_bytes // (2 * ckk_pad), 128)
    best = None
    t = 128
    while t <= hw:
        if hw % t == 0 and t <= max_lanes:
            best = t
        t += 128
    return best if best is not None else hw


@functools.partial(
    jax.jit, static_argnames=("kernel_size", "stride", "max_patch_tile_bytes"))
def conv_layer_forward(x, weight, bias, *, kernel_size, stride,
                       max_patch_tile_bytes=4 * 1024 * 1024):
    """x: (N, C, H, W); weight: (OC, IC, k, k); bias: (OC,). Returns NCHW f32."""
    n, c, h, w = x.shape
    oc = weight.shape[0]
    pad = kernel_size // 2

    # nn.ZeroPad2d(kernel_size // 2)
    xp = jnp.pad(x, ((0, 0), (0, 0), (pad, pad), (pad, pad)))

    # TODO(synk): host-side im2col still multiplies HBM reads of the input by
    # k*k; a fully fused variant would stream the padded NCHW input and do k*k
    # shifted matmuls in-kernel instead.
    patches, hout, wout = _im2col(xp, kernel_size, stride)    # (N, CKK, HW)
    hw = hout * wout
    ckk = c * kernel_size * kernel_size

    oc_pad = _round_up(oc, 8)        # sublane-aligned output channels
    ckk_pad = _round_up(ckk, 8)      # sublane-aligned contraction dim

    patches = jnp.pad(patches, ((0, 0), (0, ckk_pad - ckk), (0, 0)))
    patches = patches.astype(jnp.bfloat16)

    w_flat = weight.reshape(oc, ckk)
    w_flat = jnp.pad(w_flat, ((0, oc_pad - oc), (0, ckk_pad - ckk)))
    w_flat = w_flat.astype(jnp.bfloat16)                      # (OC_pad, CKK_pad)

    b_flat = jnp.pad(bias.astype(jnp.float32), (0, oc_pad - oc)).reshape(oc_pad, 1)

    tile_hw = _choose_tile_hw(hw, ckk_pad, max_patch_tile_bytes)
    n_tiles = hw // tile_hw

    kernel = functools.partial(_convlayer_kernel, tile_hw=tile_hw, hw=hw)

    # Rough per-step VMEM footprint -> scoped VMEM limit with headroom
    # (capped at 64 MiB so the same choice is valid on v7x).
    vmem_bytes = (2 * ckk_pad * tile_hw * 2        # double-buffered bf16 patch tile
                  + 2 * oc_pad * hw * 4            # resident f32 output block
                  + 2 * oc_pad * ckk_pad * 2       # weight
                  + 2 * oc_pad * 4                 # bias
                  + 2 * oc_pad * 4)                # stats scratch
    vmem_limit = int(min(64 * 1024 * 1024, max(4 * vmem_bytes, 16 * 1024 * 1024)))

    out = pl.pallas_call(
        kernel,
        out_shape=jax.ShapeDtypeStruct((n, oc_pad, hw), jnp.float32),
        grid_spec=pltpu.PrefetchScalarGridSpec(
            num_scalar_prefetch=0,
            grid=(n, n_tiles),
            in_specs=[
                pl.BlockSpec((None, ckk_pad, tile_hw), lambda i, t: (i, 0, t)),
                pl.BlockSpec((oc_pad, ckk_pad), lambda i, t: (0, 0)),
                pl.BlockSpec((oc_pad, 1), lambda i, t: (0, 0)),
            ],
            out_specs=pl.BlockSpec((None, oc_pad, hw), lambda i, t: (i, 0, 0)),
            scratch_shapes=[pltpu.VMEM((oc_pad, 1), jnp.float32),
                            pltpu.VMEM((oc_pad, 1), jnp.float32)],
        ),
        compiler_params=pltpu.CompilerParams(
            dimension_semantics=("parallel", "arbitrary"),
            vmem_limit_bytes=vmem_limit,
        ),
    )(patches, w_flat, b_flat)                                # (N, OC_pad, HW)

    # Drop channel padding; lane-dense layout reshapes straight to NCHW.
    return out[:, :oc, :].reshape(n, oc, hout, wout)


def _reference(x, weight, bias, *, kernel_size, stride):
    # Pure-JAX reference of the PyTorch module (f32).
    pad = kernel_size // 2
    xp = jnp.pad(x, ((0, 0), (0, 0), (pad, pad), (pad, pad)))
    y = jax.lax.conv_general_dilated(
        xp, weight, window_strides=(stride, stride), padding="VALID",
        dimension_numbers=("NCHW", "OIHW", "NCHW"))
    y = y + bias.reshape(1, -1, 1, 1)
    mean = jnp.mean(y, axis=(2, 3), keepdims=True)
    var = jnp.var(y, axis=(2, 3), keepdims=True)   # biased, as in InstanceNorm2d
    y = (y - mean) * jax.lax.rsqrt(var + EPS)
    return jnp.maximum(y, 0.0)


if __name__ == "__main__":
    N, IN_CH, H, W = 2, 4, 16, 16
    OUT_CH, K, STRIDE = 8, 3, 1

    key = jax.random.PRNGKey(0)
    kx, kw, kb = jax.random.split(key, 3)

    x = jax.random.normal(kx, (N, IN_CH, H, W), dtype=jnp.float32)

    # Deterministic parameter init (mimics PyTorch's uniform fan-in init).
    fan_in = IN_CH * K * K
    bound = 1.0 / (fan_in ** 0.5)
    weight = jax.random.uniform(kw, (OUT_CH, IN_CH, K, K),
                                minval=-bound, maxval=bound, dtype=jnp.float32)
    bias = jax.random.uniform(kb, (OUT_CH,),
                              minval=-bound, maxval=bound, dtype=jnp.float32)

    y = conv_layer_forward(x, weight, bias, kernel_size=K, stride=STRIDE)
    jax.block_until_ready(y)
    assert y.shape == (N, OUT_CH, H, W), y.shape
    assert bool(jnp.all(y >= 0.0)), "ReLU output must be non-negative"

    y_ref = _reference(x, weight, bias, kernel_size=K, stride=STRIDE)
    err = float(jnp.max(jnp.abs(y - y_ref)))
    assert jnp.allclose(y, y_ref, atol=5e-2, rtol=5e-2), f"max abs err {err}"

    # Exercise the streamed multi-HW-tile path with a tiny patch-tile budget.
    y_tiled = conv_layer_forward(x, weight, bias, kernel_size=K, stride=STRIDE,
                                 max_patch_tile_bytes=16 * 1024)
    jax.block_until_ready(y_tiled)
    assert jnp.allclose(y_tiled, y_ref, atol=5e-2, rtol=5e-2)

    print("KERNEL_OK")
</pallas_src>

<mosaic_0001>
module attributes {stable_mosaic.version = 11 : i64} {
  func.func @_convlayer_kernel(%arg0: i32, %arg1: i32, %arg2: memref<1x40x256xbf16, #tpu.memory_space<vmem>>, %arg3: memref<8x40xbf16, #tpu.memory_space<vmem>>, %arg4: memref<8x1xf32, #tpu.memory_space<vmem>>, %arg5: memref<1x8x256xf32, #tpu.memory_space<vmem>>, %arg6: memref<8x1xf32, #tpu.memory_space<vmem>>, %arg7: memref<8x1xf32, #tpu.memory_space<vmem>>) attributes {dimension_semantics = [#tpu.dimension_semantics<parallel>, #tpu.dimension_semantics<arbitrary>], iteration_bounds = array<i64: 2, 1>, scalar_prefetch = 0 : i64, scratch_operands = 2 : i64, tpu.core_type = #tpu.core_type<tc>, window_params = [{transform_indices = @transform_0, window_bounds = array<i64: 1, 40, 256>}, {pipeline_mode = #tpu.pipeline_mode<synchronous>, transform_indices = @transform_1, window_bounds = array<i64: 8, 40>}, {pipeline_mode = #tpu.pipeline_mode<synchronous>, transform_indices = @transform_2, window_bounds = array<i64: 8, 1>}, {transform_indices = @transform_3, window_bounds = array<i64: 1, 8, 256>}]} {
    %c0_i32 = arith.constant 0 : i32
    %0 = arith.cmpi eq, %arg1, %c0_i32 : i32
    %1 = arith.extui %0 : i1 to i32
    %c0_i32_0 = arith.constant 0 : i32
    %2 = arith.cmpi ne, %1, %c0_i32_0 : i32
    scf.if %2 {
      %cst_21 = arith.constant 0.000000e+00 : f32
      %30 = vector.broadcast %cst_21 : f32 to vector<8x1xf32>
      %c0_22 = arith.constant 0 : index
      %c0_23 = arith.constant 0 : index
      %31 = vector.load %arg6[%c0_22, %c0_23] : memref<8x1xf32, #tpu.memory_space<vmem>>, vector<8x1xf32>
      tpu.vector_store %arg6[%c0_22, %c0_23], %30 {strides = array<i32>} : memref<8x1xf32, #tpu.memory_space<vmem>>, vector<8x1xf32>,
      %cst_24 = arith.constant 0.000000e+00 : f32
      %32 = vector.broadcast %cst_24 : f32 to vector<8x1xf32>
      %c0_25 = arith.constant 0 : index
      %c0_26 = arith.constant 0 : index
      %33 = vector.load %arg7[%c0_25, %c0_26] : memref<8x1xf32, #tpu.memory_space<vmem>>, vector<8x1xf32>
      tpu.vector_store %arg7[%c0_25, %c0_26], %32 {strides = array<i32>} : memref<8x1xf32, #tpu.memory_space<vmem>>, vector<8x1xf32>,
    } else {
    }
    %c0 = arith.constant 0 : index
    %c0_1 = arith.constant 0 : index
    %3 = vector.load %arg3[%c0, %c0_1] : memref<8x40xbf16, #tpu.memory_space<vmem>>, vector<8x40xbf16>
    %c0_2 = arith.constant 0 : index
    %c0_3 = arith.constant 0 : index
    %c0_4 = arith.constant 0 : index
    %4 = vector.load %arg2[%c0_2, %c0_3, %c0_4] : memref<1x40x256xbf16, #tpu.memory_space<vmem>>, vector<1x40x256xbf16>
    %5 = vector.shape_cast %4 : vector<1x40x256xbf16> to vector<40x256xbf16>
    %cst = arith.constant dense<0.000000e+00> : vector<8x256xf32>
    %6 = tpu.matmul %3, %5, %cst {dimension_numbers = #tpu.dot_dimension_numbers<[1], [0], [0], [1], [0, 0, 1, 1], [], []>} : vector<8x40xbf16>, vector<40x256xbf16>, vector<8x256xf32> -> vector<8x256xf32>
    %c0_5 = arith.constant 0 : index
    %c0_6 = arith.constant 0 : index
    %7 = vector.load %arg4[%c0_5, %c0_6] : memref<8x1xf32, #tpu.memory_space<vmem>>, vector<8x1xf32>
    %8 = vector.broadcast %7 : vector<8x1xf32> to vector<8x256xf32>
    %9 = arith.addf %6, %8 : vector<8x256xf32>
    %c0_7 = arith.constant 0 : index
    %c0_8 = arith.constant 0 : index
    %10 = vector.load %arg6[%c0_7, %c0_8] : memref<8x1xf32, #tpu.memory_space<vmem>>, vector<8x1xf32>
    %cst_9 = arith.constant dense<0.000000e+00> : vector<8xf32>
    %11 = vector.multi_reduction <add>, %9, %cst_9 [1] : vector<8x256xf32> to vector<8xf32>
    %12 = vector.shape_cast %11 : vector<8xf32> to vector<8x1xf32>
    %13 = arith.addf %10, %12 : vector<8x1xf32>
    %c0_10 = arith.constant 0 : index
    %c0_11 = arith.constant 0 : index
    %14 = vector.load %arg6[%c0_10, %c0_11] : memref<8x1xf32, #tpu.memory_space<vmem>>, vector<8x1xf32>
    tpu.vector_store %arg6[%c0_10, %c0_11], %13 {strides = array<i32>} : memref<8x1xf32, #tpu.memory_space<vmem>>, vector<8x1xf32>,
    %c0_12 = arith.constant 0 : index
    %c0_13 = arith.constant 0 : index
    %15 = vector.load %arg7[%c0_12, %c0_13] : memref<8x1xf32, #tpu.memory_space<vmem>>, vector<8x1xf32>
    %16 = arith.mulf %9, %9 : vector<8x256xf32>
    %cst_14 = arith.constant dense<0.000000e+00> : vector<8xf32>
    %17 = vector.multi_reduction <add>, %16, %cst_14 [1] : vector<8x256xf32> to vector<8xf32>
    %18 = vector.shape_cast %17 : vector<8xf32> to vector<8x1xf32>
    %19 = arith.addf %15, %18 : vector<8x1xf32>
    %c0_15 = arith.constant 0 : index
    %c0_16 = arith.constant 0 : index
    %20 = vector.load %arg7[%c0_15, %c0_16] : memref<8x1xf32, #tpu.memory_space<vmem>>, vector<8x1xf32>
    tpu.vector_store %arg7[%c0_15, %c0_16], %19 {strides = array<i32>} : memref<8x1xf32, #tpu.memory_space<vmem>>, vector<8x1xf32>,
    %c256_i32 = arith.constant 256 : i32
    %21 = arith.muli %arg1, %c256_i32 : i32
    %22 = tpu.assume_multiple %21, 256 : i32
    %c0_17 = arith.constant 0 : index
    %c0_18 = arith.constant 0 : index
    %23 = arith.index_cast %22 : i32 to index
    %24 = vector.load %arg5[%c0_17, %c0_18, %23] : memref<1x8x256xf32, #tpu.memory_space<vmem>>, vector<1x8x256xf32>
    %25 = vector.shape_cast %24 : vector<1x8x256xf32> to vector<8x256xf32>
    %26 = vector.shape_cast %9 : vector<8x256xf32> to vector<1x8x256xf32>
    tpu.vector_store %arg5[%c0_17, %c0_18, %23], %26 {strides = array<i32>} : memref<1x8x256xf32, #tpu.memory_space<vmem>>, vector<1x8x256xf32>,
    %c0_i32_19 = arith.constant 0 : i32
    %27 = arith.cmpi eq, %arg1, %c0_i32_19 : i32
    %28 = arith.extui %27 : i1 to i32
    %c0_i32_20 = arith.constant 0 : i32
    %29 = arith.cmpi ne, %28, %c0_i32_20 : i32
    scf.if %29 {
      %c0_21 = arith.constant 0 : index
      %c0_22 = arith.constant 0 : index
      %30 = vector.load %arg6[%c0_21, %c0_22] : memref<8x1xf32, #tpu.memory_space<vmem>>, vector<8x1xf32>
      %cst_23 = arith.constant 3.906250e-03 : f32
      %31 = vector.broadcast %cst_23 : f32 to vector<8x1xf32>
      %32 = arith.mulf %30, %31 : vector<8x1xf32>
      %c0_24 = arith.constant 0 : index
      %c0_25 = arith.constant 0 : index
      %33 = vector.load %arg7[%c0_24, %c0_25] : memref<8x1xf32, #tpu.memory_space<vmem>>, vector<8x1xf32>
      %cst_26 = arith.constant 3.906250e-03 : f32
      %34 = vector.broadcast %cst_26 : f32 to vector<8x1xf32>
      %35 = arith.mulf %33, %34 : vector<8x1xf32>
      %36 = arith.mulf %32, %32 : vector<8x1xf32>
      %37 = arith.subf %35, %36 : vector<8x1xf32>
      %cst_27 = arith.constant 0.000000e+00 : f32
      %38 = vector.broadcast %cst_27 : f32 to vector<8x1xf32>
      %39 = arith.maximumf %37, %38 : vector<8x1xf32>
      %cst_28 = arith.constant 9.99999974E-6 : f32
      %40 = vector.broadcast %cst_28 : f32 to vector<8x1xf32>
      %41 = arith.addf %39, %40 : vector<8x1xf32>
      %42 = math.rsqrt %41 : vector<8x1xf32>
      %c0_29 = arith.constant 0 : index
      %c0_30 = arith.constant 0 : index
      %c0_31 = arith.constant 0 : index
      %43 = vector.load %arg5[%c0_29, %c0_30, %c0_31] : memref<1x8x256xf32, #tpu.memory_space<vmem>>, vector<1x8x256xf32>
      %44 = vector.shape_cast %43 : vector<1x8x256xf32> to vector<8x256xf32>
      %45 = vector.broadcast %32 : vector<8x1xf32> to vector<8x256xf32>
      %46 = arith.subf %44, %45 : vector<8x256xf32>
      %47 = vector.broadcast %42 : vector<8x1xf32> to vector<8x256xf32>
      %48 = arith.mulf %46, %47 : vector<8x256xf32>
      %cst_32 = arith.constant 0.000000e+00 : f32
      %49 = vector.broadcast %cst_32 : f32 to vector<8x256xf32>
      %50 = arith.maximumf %48, %49 : vector<8x256xf32>
      %c0_33 = arith.constant 0 : index
      %c0_34 = arith.constant 0 : index
      %c0_35 = arith.constant 0 : index
      %51 = vector.load %arg5[%c0_33, %c0_34, %c0_35] : memref<1x8x256xf32, #tpu.memory_space<vmem>>, vector<1x8x256xf32>
      %52 = vector.shape_cast %51 : vector<1x8x256xf32> to vector<8x256xf32>
      %53 = vector.shape_cast %50 : vector<8x256xf32> to vector<1x8x256xf32>
      tpu.vector_store %arg5[%c0_33, %c0_34, %c0_35], %53 {strides = array<i32>} : memref<1x8x256xf32, #tpu.memory_space<vmem>>, vector<1x8x256xf32>,
    } else {
    }
    return
  }
  func.func @transform_0(%arg0: i32, %arg1: i32) -> (i32, i32, i32) {
    %c0_i32 = arith.constant 0 : i32
    %c0_i32_0 = arith.constant 0 : i32
    return %arg0, %c0_i32, %arg1 : i32, i32, i32
  }
  func.func @transform_1(%arg0: i32, %arg1: i32) -> (i32, i32) {
    %c0_i32 = arith.constant 0 : i32
    %c0_i32_0 = arith.constant 0 : i32
    %c0_i32_1 = arith.constant 0 : i32
    return %c0_i32, %c0_i32_0 : i32, i32
  }
  func.func @transform_2(%arg0: i32, %arg1: i32) -> (i32, i32) {
    %c0_i32 = arith.constant 0 : i32
    %c0_i32_0 = arith.constant 0 : i32
    %c0_i32_1 = arith.constant 0 : i32
    return %c0_i32, %c0_i32_0 : i32, i32
  }
  func.func @transform_3(%arg0: i32, %arg1: i32) -> (i32, i32, i32) {
    %c0_i32 = arith.constant 0 : i32
    %c0_i32_0 = arith.constant 0 : i32
    %c0_i32_1 = arith.constant 0 : i32
    return %arg0, %c0_i32, %c0_i32_0 : i32, i32, i32
  }
}

</mosaic_0001>

<llo_original>
// kernel: conv_layer_forward.1
$region0: #{conv_layer_forward.1}
  #allocation0 [shape = 'u32[]', space=smem, size = 0x4, offset = 0x4, fixed_abs, tag = 'smem constant byte address 0x4 - core index']
  #allocation1 [shape = 'u32[72,128]{1,0:T(1,128)}', space=vmem, size = 0x9000, scoped, tag = 'internal scratch']
  #allocation2 [shape = 'f32[8,1]{1,0:T(8,128)}', space=vmem, size = 0x1000, scoped, tag = 'scratch operand']
  #allocation3 [shape = 'f32[8,1]{1,0:T(8,128)}', space=vmem, size = 0x1000, scoped, tag = 'scratch operand']
  %s0 = inlined_call_operand.vmem [shape: bf16[2,40,256], index: 0, kind: input, shape index: {}]
  %s1 = inlined_call_operand.vmem [shape: bf16[8,40], index: 1, kind: input, shape index: {}]
  %s2 = inlined_call_operand.vmem [shape: f32[8,1], index: 2, kind: input, shape index: {}]
  %s3 = inlined_call_operand.vmem [shape: f32[2,8,256], index: 3, kind: output, shape index: {}]
  %s4 = sld [smem:[#allocation0]]
  $region53: #{conv_layer_forward.1} parent=0
    _
  %s6 = ssub.s32 1, %s4
  %s7 = scalar_select 0, %s6, %s4
  loop: start=0, step=1, limit=4
  $region2: #{conv_layer_forward.1} parent=0 // loop_pre_header
    _
  $region3: #{conv_layer_forward.1} parent=0 // loop_header
    %s9 = sphi 0, %s13
    %p10 = scmp.ge.s32.totalorder %s9, 4
    %s16 = sphi 0, %s28
    %s17 = sphi 0, %s24
    %s18 = sphi 0, %s16
    %s19 = sphi 0, %s17
    %s20 = sphi 0, %s18
    %s21 = sphi 0, %s19
    %s33 = sphi 0, %s35
    %s36 = sphi 0, %s33
    %s37 = sphi 0, %s36
    %s53 = sphi 0, %s37
    %s57 = sphi 0, %s57
    %s59 = sphi 0, %s57
    %s60 = sphi 0, %s59
    %s74 = sphi 0, %s60
    %s78 = sphi 0, %s78
    %s80 = sphi 0, %s78
    %s81 = sphi 0, %s80
    %s95 = sphi 0, %s81
    %s101 = sphi 0, %s103
    %s104 = sphi 0, %s101
    %s105 = sphi 0, %s104
    %s121 = sphi 0, %s105
  $region4: #{conv_layer_forward.1} parent=0 // loop_header_branch
    %12 = sbr.rel (%p10) target = $region8
  $region5: #{conv_layer_forward.1} parent=0 // loop_body
    %s14 = ssub.s32 %s9, 1
    %s15 = ssub.s32 %s9, 2
    %s22 = sadd.s32 1, %s17
    %p23 = scmp.ge.s32.totalorder %s22, 1
    %s24 = scalar_select %p23, 0, %s22
    %s25 = sadd.s32 1, %s16
    %s26 = scalar_select %p23, %s25, %s16
    %p27 = scmp.ge.s32.totalorder %s26, 2
    %s28 = scalar_select %p27, 0, %s26
    %s29 = ssub.s32 %s16, %s28
    %s30 = ssub.s32 %s17, %s24
    %s31 = sor.u32 %s29, %s30
    %p32 = scmp.eq.s32.totalorder %s31, 0
    %s34 = sadd.s32 %s33, 1
    %s35 = scalar_select %p32, %s33, %s34
    %p38 = pneg %p32
    %p39 = scmp.eq.s32.totalorder %s9, 1
    %p40 = por %p38, %p39
    %p41 = scmp.ne.s32.totalorder %s33, %s36
    %p42 = scmp.eq.s32.totalorder %s9, 0
    %p43 = por %p41, %p42
    %p44 = scmp.ne.s32.totalorder %s33, %s36
    %p45 = scmp.eq.s32.totalorder %s14, 1
    %p46 = por %p44, %p45
    %p47 = scmp.ne.s32.totalorder %s36, %s37
    %p48 = scmp.eq.s32.totalorder %s14, 0
    %p49 = por %p47, %p48
    %p50 = scmp.ne.s32.totalorder %s36, %s37
    %p51 = scmp.eq.s32.totalorder %s15, 1
    %p52 = por %p50, %p51
    %p54 = scmp.ne.s32.totalorder %s37, %s53
    %p55 = scmp.eq.s32.totalorder %s15, 0
    %p56 = por %p54, %p55
    %s58 = sadd.s32 %s57, 1
    %p61 = scmp.eq.s32.totalorder %s9, 1
    %p62 = scmp.ne.s32.totalorder %s57, %s59
    %p63 = scmp.eq.s32.totalorder %s9, 0
    %p64 = por %p62, %p63
    %p65 = scmp.ne.s32.totalorder %s57, %s59
    %p66 = scmp.eq.s32.totalorder %s14, 1
    %p67 = por %p65, %p66
    %p68 = scmp.ne.s32.totalorder %s59, %s60
    %p69 = scmp.eq.s32.totalorder %s14, 0
    %p70 = por %p68, %p69
    %p71 = scmp.ne.s32.totalorder %s59, %s60
    %p72 = scmp.eq.s32.totalorder %s15, 1
    %p73 = por %p71, %p72
    %p75 = scmp.ne.s32.totalorder %s60, %s74
    %p76 = scmp.eq.s32.totalorder %s15, 0
    %p77 = por %p75, %p76
    %s79 = sadd.s32 %s78, 1
    %p82 = scmp.eq.s32.totalorder %s9, 1
    %p83 = scmp.ne.s32.totalorder %s78, %s80
    %p84 = scmp.eq.s32.totalorder %s9, 0
    %p85 = por %p83, %p84
    %p86 = scmp.ne.s32.totalorder %s78, %s80
    %p87 = scmp.eq.s32.totalorder %s14, 1
    %p88 = por %p86, %p87
    %p89 = scmp.ne.s32.totalorder %s80, %s81
    %p90 = scmp.eq.s32.totalorder %s14, 0
    %p91 = por %p89, %p90
    %p92 = scmp.ne.s32.totalorder %s80, %s81
    %p93 = scmp.eq.s32.totalorder %s15, 1
    %p94 = por %p92, %p93
    %p96 = scmp.ne.s32.totalorder %s81, %s95
    %p97 = scmp.eq.s32.totalorder %s15, 0
    %p98 = por %p96, %p97
    %s99 = ssub.s32 %s16, %s28
    %p100 = scmp.eq.s32.totalorder %s99, 0
    %s102 = sadd.s32 %s101, 1
    %s103 = scalar_select %p100, %s101, %s102
    %p106 = pneg %p100
    %p107 = scmp.eq.s32.totalorder %s9, 1
    %p108 = por %p106, %p107
    %p109 = scmp.ne.s32.totalorder %s101, %s104
    %p110 = scmp.eq.s32.totalorder %s9, 0
    %p111 = por %p109, %p110
    %p112 = scmp.ne.s32.totalorder %s101, %s104
    %p113 = scmp.eq.s32.totalorder %s14, 1
    %p114 = por %p112, %p113
    %p115 = scmp.ne.s32.totalorder %s104, %s105
    %p116 = scmp.eq.s32.totalorder %s14, 0
    %p117 = por %p115, %p116
    %p118 = scmp.ne.s32.totalorder %s104, %s105
    %p119 = scmp.eq.s32.totalorder %s15, 1
    %p120 = por %p118, %p119
    %p122 = scmp.ne.s32.totalorder %s105, %s121
    %p123 = scmp.eq.s32.totalorder %s15, 0
    %p124 = por %p122, %p123
    %p125 = scmp.le.s32.totalorder 1, %s9
    %p126 = scmp.lt.s32.totalorder %s9, 3
    %p127 = pnand %p125, %p126
    %p128 = pneg %p127
    // Predicated region
    $region9: #{conv_layer_forward.1} parent=5 // pred_check
      _
    $region10: #{conv_layer_forward.1} parent=5 // pred_check_branch
      %130 = sbr.rel (%p127) target = $region12
    $region11: #{conv_layer_forward.1} parent=5 // pred_region
      %s131 = ssub.s32 %s9, 1
      // Predicated region
      $region13: #{conv_layer_forward.1} parent=11 // pred_check
        %p132 = pneg %p70
      $region14: #{conv_layer_forward.1} parent=11 // pred_check_branch
        %134 = sbr.rel (%p132) target = $region16
      $region15: #{conv_layer_forward.1} parent=11 // pred_region
        _
      $region16: #{conv_layer_forward.1} parent=11 // pred_fallthru
        _
      // Predicated region
      $region17: #{conv_layer_forward.1} parent=11 // pred_check
        %p135 = pneg %p91
      $region18: #{conv_layer_forward.1} parent=11 // pred_check_branch
        %137 = sbr.rel (%p135) target = $region20
      $region19: #{conv_layer_forward.1} parent=11 // pred_region
        _
      $region20: #{conv_layer_forward.1} parent=11 // pred_fallthru
        _
    $region12: #{conv_layer_forward.1} parent=5 // pred_fallthru
      _
    %p138 = scmp.lt.s32.totalorder %s9, 2
    // Predicated region
    $region21: #{conv_layer_forward.1} parent=5 // pred_check
      %p139 = pneg %p138
    $region22: #{conv_layer_forward.1} parent=5 // pred_check_branch
      %141 = sbr.rel (%p139) target = $region24
    $region23: #{conv_layer_forward.1} parent=5 // pred_region
      // Predicated region
      $region25: #{conv_layer_forward.1} parent=23 // pred_check
        %p142 = pneg %p43
      $region26: #{conv_layer_forward.1} parent=23 // pred_check_branch
        %144 = sbr.rel (%p142) target = $region28
      $region27: #{conv_layer_forward.1} parent=23 // pred_region
        %s145 = smul.u32 2, %s17
        %p146 = scmp.lt.s32.totalorder %s16, 1
        %s147 = scalar_select %p146, %s16, 1
        %p148 = scmp.lt.s32.totalorder %s145, 1
        %s149 = scalar_select %p148, %s145, 1
        %s150 = smul.addr %s147, 10
        %s151 = sadd.s32 %s149, %s150
        %s152 = smul.addr %s151, 4
        %s153 = scalar_lea.vmem %s0, %s152
        %s154 = smul.u32 2, %s17
      $region28: #{conv_layer_forward.1} parent=23 // pred_fallthru
        _
    $region24: #{conv_layer_forward.1} parent=5 // pred_fallthru
      _
    %p155 = scmp.le.s32.totalorder 1, %s9
    %p156 = scmp.lt.s32.totalorder %s9, 3
    %p157 = pnand %p155, %p156
    %p158 = pneg %p157
    // Predicated region
    $region29: #{conv_layer_forward.1} parent=5 // pred_check
      _
    $region30: #{conv_layer_forward.1} parent=5 // pred_check_branch
      %160 = sbr.rel (%p157) target = $region32
    $region31: #{conv_layer_forward.1} parent=5 // pred_region
      %s161 = ssub.s32 %s9, 1
      %s162 = smul.u32 2, %s19
      %p163 = scmp.lt.s32.totalorder %s18, 1
      %s164 = scalar_select %p163, %s18, 1
      %p165 = scmp.lt.s32.totalorder %s162, 1
      %s166 = scalar_select %p165, %s162, 1
      %s167 = smul.addr %s164, 10
      %s168 = sadd.s32 %s166, %s167
      %s169 = smul.addr %s168, 4
      %s170 = scalar_lea.vmem %s0, %s169
      %p171 = pneg %p49
      %p172 = pneg %p46
      %p173 = pneg %p70
      %p174 = pneg %p67
      %p175 = pneg %p91
      %p176 = pneg %p88
      %p177 = pneg %p117
      %p178 = pneg %p114
      %p179 = scmp.lt.s32.totalorder %s18, 1
      %s180 = scalar_select %p179, %s18, 1
      %s181 = smul.addr %s180, 2
      %s182 = smul.addr %s181, 8
      %s183 = scalar_lea.vmem %s3, %s182
      %s184 = smul.u32 2, %s19
      %p185 = scmp.lt.s32.totalorder %s18, 1
      %s186 = scalar_select %p185, %s18, 1
      %p187 = scmp.lt.s32.totalorder %s184, 1
      %s188 = scalar_select %p187, %s184, 1
      %s189 = smul.addr %s186, 10
      %s190 = sadd.s32 %s188, %s189
      %s191 = smul.addr %s190, 4
      %s192 = scalar_lea.vmem %s0, %s191
      %s193 = smul.u32 2, %s19
      %p194 = scmp.lt.s32.totalorder %s18, 1
      %s195 = scalar_select %p194, %s18, 1
      %s196 = smul.addr %s195, 2
      %s197 = smul.addr %s196, 8
      %s198 = scalar_lea.vmem %s3, %s197
      %p200 = scmp.eq.s32.totalorder %s19, 0
      // Predicated region
      $region33: #{conv_layer_forward.1} parent=31 // pred_check
        %p201 = pneg %p200
      $region34: #{conv_layer_forward.1} parent=31 // pred_check_branch
        %203 = sbr.rel (%p201) target = $region36
      $region35: #{conv_layer_forward.1} parent=31 // pred_region
        %vm204 = vcmask 7168
        %205 = vst.msk [vmem:[#allocation2] sm:$0xff] %vm204, 0.0
        %206 = vst.msk [vmem:[#allocation3] sm:$0xff] %vm204, 0.0
      $region36: #{conv_layer_forward.1} parent=31 // pred_fallthru
        _
      %v207 = vld [vmem:[%s1] sm:$0xf]
      %v208 = vld [vmem:[%s192] sm:$0xff]
      %v209 = vld [vmem:[%s192 + $0x8] sm:$0xff]
      %v210 = vld [vmem:[%s192 + $0x10] sm:$0xff]
      %v211 = vld [vmem:[%s192 + $0x18] sm:$0xff]
      %v212 = vld [vmem:[%s192 + $0x20] sm:$0xff]
      %v213 = vld [vmem:[%s2] sm:$0xff]
      %215 = vset.pattern.permute.xlu0 0
      %216 = vperm.xlu0 %215, %v213
      %v217 = vpop.permute.xlu0 %216
      %v224 = vunpack.c.l.b16 %v208
      %v225 = vunpack.c.h.b16 %v208
      %v226 = vunpack.c.l.b16 %v209
      %v227 = vunpack.c.h.b16 %v209
      %v228 = vunpack.c.l.b16 %v210
      %v229 = vunpack.c.h.b16 %v210
      %v230 = vunpack.c.l.b16 %v211
      %v231 = vunpack.c.h.b16 %v211
      %v232 = vunpack.c.l.b16 %v212
      %v233 = vunpack.c.h.b16 %v212
      %v234 = vpack.c.b16 %v226, %v224
      %v235 = vpack.c.b16 %v227, %v225
      %v236 = vpack.c.b16 %v230, %v228
      %v237 = vpack.c.b16 %v231, %v229
      %v238 = vpack.c.b16 %v232, %v232
      %v239 = vpack.c.b16 %v233, %v233
      %vm244 = vcmask 326656
      %v246 = vsel %vm244, %v207, 0
      %vm248 = vcmask 1043456
      %v250 = vsel %vm248, %v238, 0
      %v253 = vsel %vm248, %v239, 0
      %255 = vmatpush.bf16.msra.mxu0 0
      %256 = vmatpush.bf16.msra.mxu0 0
      %257 = vmatpush.bf16.msra.mxu0 0
      %258 = vmatpush.bf16.msra.mxu0 0
      %259 = vmatpush.bf16.msra.mxu0 0
      %260 = vmatpush.bf16.msra.mxu0 %v250
      %261 = vmatpush.bf16.msra.mxu0 %v236
      %262 = vmatpush.bf16.msra.mxu0 %v234
      %263 = vmatmul.bf16.gmra.mxu0 %v246
      %v264 = vpop.f32.mrf.mxu0
      %v265 = vadd.f32 %v217, %v264
      %v266 = vpop.f32.mrf.mxu0
      %267 = vdwg.mxu0
      %268 = vmatpush.bf16.msra.mxu0 0
      %269 = vmatpush.bf16.msra.mxu0 0
      %270 = vmatpush.bf16.msra.mxu0 0
      %271 = vmatpush.bf16.msra.mxu0 0
      %272 = vmatpush.bf16.msra.mxu0 0
      %273 = vmatpush.bf16.msra.mxu0 %v253
      %274 = vmatpush.bf16.msra.mxu0 %v237
      %275 = vmatpush.bf16.msra.mxu0 %v235
      %276 = vmatmul.bf16.gmra.mxu0 %v246
      %v277 = vpop.f32.mrf.mxu0
      %v278 = vadd.f32 %v217, %v277
      %v279 = vpop.f32.mrf.mxu0
      %280 = vdwg.mxu0
      %v281 = vld [vmem:[#allocation2] sm:$0xff]
      %v282 = vadd.f32 %v265, %v278
      %283 = vadd.xlane.f32.xlu0 %v282
      %v284 = vpop.xlane.xlu0 %283
      %v285 = vadd.f32 %v281, %v284
      %vm286 = vcmask 7168
      %287 = vst.msk [vmem:[#allocation2] sm:$0xff] %vm286, %v285
      %v288 = vld [vmem:[#allocation3] sm:$0xff]
      %v289 = vmul.f32 %v265, %v265
      %v290 = vmul.f32 %v278, %v278
      %v291 = vadd.f32 %v289, %v290
      %292 = vadd.xlane.f32.xlu0 %v291
      %v293 = vpop.xlane.xlu0 %292
      %v294 = vadd.f32 %v288, %v293
      %295 = vst.msk [vmem:[#allocation3] sm:$0xff] %vm286, %v294
      %s296 = smul.u32 %s19, 256
      %s297 = sshra.s32 %s296, 7
      %s298 = sand.u32 %s296, 127
      %s299 = smul.addr %s297, 8
      %s300 = scalar_lea.vmem %s198, %s299
      %301 = vst [vmem:[%s300] sm:$0xff] %v265
      %302 = vst [vmem:[%s300 + $0x8] sm:$0xff] %v278
      // Predicated region
      $region37: #{conv_layer_forward.1} parent=31 // pred_check
        %p303 = pneg %p200
      $region38: #{conv_layer_forward.1} parent=31 // pred_check_branch
        %305 = sbr.rel (%p303) target = $region40
      $region39: #{conv_layer_forward.1} parent=31 // pred_region
        %v306 = vld [vmem:[#allocation2] sm:$0xff]
        %v307 = vmul.f32 %v306, 0.00390625
        %v308 = vld [vmem:[#allocation3] sm:$0xff]
        %v309 = vmul.f32 %v308, 0.00390625
        %v310 = vmul.f32 %v307, %v307
        %v311 = vsub.f32 %v309, %v310
        %v312 = vmax.f32 %v311, 0.0
        %v313 = vadd.f32 %v312, 1e-05
        %v314 = vrsqrt.pop %v313
        %v315 = vmul.f32 %v314, %v313
        %v316 = vmul.f32 %v315, %v314
        %v317 = vmul.f32 0.5, %v316
        %v318 = vsub.f32 1.5, %v317
        %v319 = vmul.f32 %v314, %v318
        %vm320 = vweird.f32 %v313
        %vm321 = vweird.f32 %v314
        %vm322 = vmor %vm320, %vm321
        %v323 = vsel %vm322, %v314, %v319
        %v324 = vld [vmem:[%s198] sm:$0xff]
        %v325 = vld [vmem:[%s198 + $0x8] sm:$0xff]
        %327 = vset.pattern.permute.xlu0 0
        %328 = vperm.xlu0 %327, %v307
        %v329 = vpop.permute.xlu0 %328
        %v331 = vsub.f32 %v324, %v329
        %v332 = vsub.f32 %v325, %v329
        %334 = vset.pattern.permute.xlu0 0
        %335 = vperm.xlu0 %334, %v323
        %v336 = vpop.permute.xlu0 %335
        %v338 = vmul.f32 %v331, %v336
        %v339 = vmul.f32 %v332, %v336
        %v340 = vmax.f32 %v338, 0.0
        %v341 = vmax.f32 %v339, 0.0
        %342 = vst [vmem:[%s198] sm:$0xff] %v340
        %343 = vst [vmem:[%s198 + $0x8] sm:$0xff] %v341
      $region40: #{conv_layer_forward.1} parent=31 // pred_fallthru
        _
      %p344 = scmp.lt.s32.totalorder %s18, 1
      %s345 = scalar_select %p344, %s18, 1
      %s346 = smul.addr %s345, 2
      %s347 = smul.addr %s346, 8
      %s348 = scalar_lea.vmem %s3, %s347
      // Predicated region
      $region41: #{conv_layer_forward.1} parent=31 // pred_check
        %p349 = pneg %p114
      $region42: #{conv_layer_forward.1} parent=31 // pred_check_branch
        %351 = sbr.rel (%p349) target = $region44
      $region43: #{conv_layer_forward.1} parent=31 // pred_region
        _
      $region44: #{conv_layer_forward.1} parent=31 // pred_fallthru
        _
    $region32: #{conv_layer_forward.1} parent=5 // pred_fallthru
      _
    %p352 = scmp.le.s32.totalorder 2, %s9
    // Predicated region
    $region45: #{conv_layer_forward.1} parent=5 // pred_check
      %p353 = pneg %p352
    $region46: #{conv_layer_forward.1} parent=5 // pred_check_branch
      %355 = sbr.rel (%p353) target = $region48
    $region47: #{conv_layer_forward.1} parent=5 // pred_region
      %s356 = ssub.s32 %s9, 2
      // Predicated region
      $region49: #{conv_layer_forward.1} parent=47 // pred_check
        %p357 = pneg %p120
      $region50: #{conv_layer_forward.1} parent=47 // pred_check_branch
        %359 = sbr.rel (%p357) target = $region52
      $region51: #{conv_layer_forward.1} parent=47 // pred_region
        %p360 = scmp.lt.s32.totalorder %s20, 1
        %s361 = scalar_select %p360, %s20, 1
        %s362 = smul.addr %s361, 2
        %s363 = smul.addr %s362, 8
        %s364 = scalar_lea.vmem %s3, %s363
      $region52: #{conv_layer_forward.1} parent=47 // pred_fallthru
        _
    $region48: #{conv_layer_forward.1} parent=5 // pred_fallthru
      _
  $region6: #{conv_layer_forward.1} parent=0 // loop_footer
    %s13 = sadd.s32 1, %s9
  $region7: #{conv_layer_forward.1} parent=0 // loop_footer_branch
    %8 = sbr.rel target = $region3
  $region8: #{conv_layer_forward.1} parent=0 // loop_exit
    _

</llo_original>
